<compile_context>
chip_gen: v7x
topology: tpu7x:2x2x1
jax: 0.10.0
libtpu: 0.0.40
codegen_flags: <defaults>
</compile_context>

<pallas_src>
import jax
import jax.numpy as jnp
from jax import lax
from jax.experimental import pallas as pl
from jax.experimental.pallas import tpu as pltpu

NUM_CLASSES = 3


# ---------------------------------------------------------------------------
# VMEM sizing helpers
# ---------------------------------------------------------------------------
def _vmem_capacity_bytes():
    # Physical per-core VMEM: 128 MiB on v5e/v6e, 64 MiB on v7x.  Fall back to
    # the smallest (v7x) so any guess stays safe on every generation.
    try:
        info = pltpu.get_tpu_info()
        cap = int(getattr(info, "vmem_capacity_bytes", 0) or 0)
        if cap > 0:
            return cap
    except Exception:
        pass
    return 64 << 20


def _pick_batch_tile(batch, d, itemsize, cap):
    # ~40% of physical VMEM for the double-buffered x stream: ~25 MiB on v7x,
    # ~51 MiB on v5e/v6e, leaving room for w/b/y/outputs and compiler scratch.
    budget = int(cap * 0.40)
    per_row = 2 * d * itemsize  # two in-flight x buffers per batch row
    for tb in (16384, 8192, 4096, 2048, 1024, 512, 256, 128, 64, 32, 16, 8):
        if batch % tb == 0 and tb * per_row <= budget:
            return tb
    return batch  # small / odd batch: single full-array block


def _vmem_limit_bytes(tb, d, c, itemsize, cap):
    need = 2 * tb * d * itemsize        # double-buffered x stream
    need += 2 * d * c * itemsize        # w
    need += 2 * tb * (c + 1) * 4        # y_pred output + y targets
    need += 2 * 8 * 128 * 4             # loss partial tiles
    need += 4 << 20                     # headroom for compiler scratch
    # Above the 16/32 MiB scoped defaults, but inside physical VMEM.
    return int(min(max(need, 32 << 20), int(cap * 0.85)))


# ---------------------------------------------------------------------------
# Kernel bodies
# ---------------------------------------------------------------------------
def _sigmoid(z):
    # Exact sigmoid: the kernel is HBM-bound, so the extra EUP/VALU work is
    # hidden under the DMA and we keep bit-level parity with torch.sigmoid.
    return 1.0 / (1.0 + jnp.exp(-z))


def _forward(x_ref, w_ref, b_ref):
    # bf16 x/w stream -> MXU with f32 accumulation; everything after is f32.
    logits = jnp.dot(x_ref[...], w_ref[...], preferred_element_type=jnp.float32)
    logits = logits + b_ref[...].astype(jnp.float32)
    return _sigmoid(logits)


def _nll_rows(yp, y_ref):
    # Reproduces the reference's (unusual but intended) CrossEntropyLoss over
    # the *sigmoid outputs*: log_softmax over classes, NLL at the target index.
    m = jnp.max(yp, axis=-1, keepdims=True)
    e = jnp.exp(yp - m)                       # single EUP exp pass
    lse = m + jnp.log(jnp.sum(e, axis=-1, keepdims=True))
    logprob = yp - lse                        # (TB, C)
    cls = lax.broadcasted_iota(jnp.int32, yp.shape, 1)
    picked = jnp.where(cls == y_ref[...], logprob, 0.0)   # in-kernel one-hot
    return -jnp.sum(picked, axis=-1, keepdims=True)       # (TB, 1)


def _infer_kernel(x_ref, w_ref, b_ref, ypred_ref):
    ypred_ref[...] = _forward(x_ref, w_ref, b_ref).astype(jnp.float32)


def _loss_kernel(x_ref, w_ref, b_ref, y_ref, part_ref):
    i = pl.program_id(1)

    @pl.when(i == 0)
    def _init():
        part_ref[...] = jnp.zeros_like(part_ref)

    yp = _forward(x_ref, w_ref, b_ref)
    part_ref[...] += jnp.sum(_nll_rows(yp, y_ref))


def _fused_kernel(x_ref, w_ref, b_ref, y_ref, ypred_ref, part_ref):
    i = pl.program_id(1)

    @pl.when(i == 0)
    def _init():
        part_ref[...] = jnp.zeros_like(part_ref)

    yp = _forward(x_ref, w_ref, b_ref)
    ypred_ref[...] = yp.astype(jnp.float32)
    part_ref[...] += jnp.sum(_nll_rows(yp, y_ref))


# ---------------------------------------------------------------------------
# Wrapper
# ---------------------------------------------------------------------------
def torch_model_forward(x, w, b, y=None, *, return_y_pred=False,
                        stream_dtype=jnp.bfloat16):
    """Pallas equivalent of TorchModel.forward.

    x: (B, D) float32, w: (D, 3) float32, b: (1, 3) or (3,) float32,
    y: optional (B,) int class indices.
    Returns y_pred (B, 3) f32 if y is None, else the scalar CE loss (f32).
    With return_y_pred=True and y given, returns (y_pred, loss) from one launch.
    """
    B, D = x.shape
    C = NUM_CLASSES
    cap = _vmem_capacity_bytes()
    itemsize = jnp.dtype(stream_dtype).itemsize
    TB = _pick_batch_tile(B, D, itemsize, cap)
    num_tiles = B // TB if B % TB == 0 else 1
    vmem_limit = _vmem_limit_bytes(TB, D, C, itemsize, cap)

    xs = x.astype(stream_dtype)
    ws = w.astype(stream_dtype)
    bf = jnp.asarray(b, jnp.float32).reshape(1, C)

    if y is None:
        return pl.pallas_call(
            _infer_kernel,
            grid=(num_tiles,),
            in_specs=[pl.BlockSpec((TB, D), lambda i: (i, 0)),
                      pl.BlockSpec((D, C), lambda i: (0, 0)),
                      pl.BlockSpec((1, C), lambda i: (0, 0))],
            out_specs=pl.BlockSpec((TB, C), lambda i: (i, 0)),
            out_shape=jax.ShapeDtypeStruct((B, C), jnp.float32),
            compiler_params=pltpu.CompilerParams(
                dimension_semantics=("parallel",),
                vmem_limit_bytes=vmem_limit),
        )(xs, ws, bf)

    # ---- loss path: 2-D grid (NS parallel slices x reduction steps) --------
    NS = 2 if (num_tiles % 2 == 0 and num_tiles >= 2) else 1
    steps = num_tiles // NS
    y2d = y.astype(jnp.int32).reshape(B, 1)

    x_spec = pl.BlockSpec((TB, D), lambda c, i: (c * steps + i, 0))
    w_spec = pl.BlockSpec((D, C), lambda c, i: (0, 0))
    b_spec = pl.BlockSpec((1, C), lambda c, i: (0, 0))
    y_spec = pl.BlockSpec((TB, 1), lambda c, i: (c * steps + i, 0))
    part_spec = pl.BlockSpec((1, 8, 128), lambda c, i: (c, 0, 0))
    part_shape = jax.ShapeDtypeStruct((NS, 8, 128), jnp.float32)
    cp = pltpu.CompilerParams(
        dimension_semantics=("parallel", "arbitrary"),
        vmem_limit_bytes=vmem_limit)
    inv_b = jnp.float32(1.0 / B)

    if return_y_pred:
        yp_spec = pl.BlockSpec((TB, C), lambda c, i: (c * steps + i, 0))
        y_pred, parts = pl.pallas_call(
            _fused_kernel,
            grid=(NS, steps),
            in_specs=[x_spec, w_spec, b_spec, y_spec],
            out_specs=[yp_spec, part_spec],
            out_shape=(jax.ShapeDtypeStruct((B, C), jnp.float32), part_shape),
            compiler_params=cp,
        )(xs, ws, bf, y2d)
        return y_pred, jnp.sum(parts[:, 0, 0]) * inv_b

    parts = pl.pallas_call(
        _loss_kernel,
        grid=(NS, steps),
        in_specs=[x_spec, w_spec, b_spec, y_spec],
        out_specs=part_spec,
        out_shape=part_shape,
        compiler_params=cp,
    )(xs, ws, bf, y2d)
    return jnp.sum(parts[:, 0, 0]) * inv_b


# ---------------------------------------------------------------------------
# Self-test
# ---------------------------------------------------------------------------
if __name__ == "__main__":
    B, D = 8, 32  # batch=8, input_size=32

    key = jax.random.PRNGKey(0)
    kw, kb, kx, ky = jax.random.split(key, 4)

    # Mimic nn.Linear's uniform(-1/sqrt(D), 1/sqrt(D)) init
    bound = 1.0 / jnp.sqrt(jnp.float32(D))
    w = jax.random.uniform(kw, (D, NUM_CLASSES), jnp.float32, -bound, bound)
    b = jax.random.uniform(kb, (1, NUM_CLASSES), jnp.float32, -bound, bound)

    x = jax.random.normal(kx, (B, D), jnp.float32)
    y = jax.random.randint(ky, (B,), 0, NUM_CLASSES, jnp.int32)

    # Training-mode forward (scalar CE loss), inference-mode forward, and the
    # fused single-launch path.
    loss = jax.block_until_ready(torch_model_forward(x, w, b, y))
    y_pred = jax.block_until_ready(torch_model_forward(x, w, b))
    y_pred2, loss2 = jax.block_until_ready(
        torch_model_forward(x, w, b, y, return_y_pred=True))

    # Reference matching the bf16 streams the kernel uses (f32 accumulation).
    xs, ws = x.astype(jnp.bfloat16), w.astype(jnp.bfloat16)
    logits_ref = jnp.dot(xs, ws, preferred_element_type=jnp.float32) + b
    yp_ref = jax.nn.sigmoid(logits_ref)
    lp_ref = jax.nn.log_softmax(yp_ref, axis=-1)
    loss_ref = -jnp.mean(lp_ref[jnp.arange(B), y])

    # Pure-f32 reference (what the PyTorch module computes).
    yp_f32 = jax.nn.sigmoid(x @ w + b)
    loss_f32 = -jnp.mean(jax.nn.log_softmax(yp_f32, axis=-1)[jnp.arange(B), y])

    assert jnp.allclose(y_pred, yp_ref, atol=2e-3), "y_pred mismatch (bf16 ref)"
    assert jnp.allclose(loss, loss_ref, atol=2e-3), "loss mismatch (bf16 ref)"
    assert jnp.allclose(y_pred2, y_pred, atol=1e-5), "fused y_pred mismatch"
    assert jnp.allclose(loss2, loss, atol=1e-5), "fused loss mismatch"
    assert jnp.allclose(y_pred, yp_f32, atol=1e-2), "y_pred mismatch (f32 ref)"
    assert jnp.allclose(loss, loss_f32, atol=1e-2), "loss mismatch (f32 ref)"

    print("KERNEL_OK")
</pallas_src>

<mosaic_0001>
module attributes {stable_mosaic.version = 11 : i64} {
  func.func @_loss_kernel(%arg0: i32, %arg1: i32, %arg2: memref<8x32xbf16, #tpu.memory_space<vmem>>, %arg3: memref<32x3xbf16, #tpu.memory_space<vmem>>, %arg4: memref<1x3xf32, #tpu.memory_space<vmem>>, %arg5: memref<8x1xi32, #tpu.memory_space<vmem>>, %arg6: memref<1x8x128xf32, #tpu.memory_space<vmem>>) attributes {dimension_semantics = [#tpu.dimension_semantics<parallel>, #tpu.dimension_semantics<arbitrary>], iteration_bounds = array<i64: 1, 1>, scalar_prefetch = 0 : i64, scratch_operands = 0 : i64, tpu.core_type = #tpu.core_type<tc>, window_params = [{transform_indices = @transform_0, window_bounds = array<i64: 8, 32>}, {pipeline_mode = #tpu.pipeline_mode<synchronous>, transform_indices = @transform_1, window_bounds = array<i64: 32, 3>}, {pipeline_mode = #tpu.pipeline_mode<synchronous>, transform_indices = @transform_2, window_bounds = array<i64: 1, 3>}, {transform_indices = @transform_3, window_bounds = array<i64: 8, 1>}, {transform_indices = @transform_4, window_bounds = array<i64: 1, 8, 128>}]} {
    %c0_i32 = arith.constant 0 : i32
    %0 = arith.cmpi eq, %arg1, %c0_i32 : i32
    %1 = arith.extui %0 : i1 to i32
    %c0_i32_0 = arith.constant 0 : i32
    %2 = arith.cmpi ne, %1, %c0_i32_0 : i32
    scf.if %2 {
      %cst_23 = arith.constant 0.000000e+00 : f32
      %45 = vector.broadcast %cst_23 : f32 to vector<1x8x128xf32>
      %c0_24 = arith.constant 0 : index
      %c0_25 = arith.constant 0 : index
      %c0_26 = arith.constant 0 : index
      %46 = vector.load %arg6[%c0_24, %c0_25, %c0_26] : memref<1x8x128xf32, #tpu.memory_space<vmem>>, vector<1x8x128xf32>
      tpu.vector_store %arg6[%c0_24, %c0_25, %c0_26], %45 {strides = array<i32>} : memref<1x8x128xf32, #tpu.memory_space<vmem>>, vector<1x8x128xf32>,
    } else {
    }
    %c0 = arith.constant 0 : index
    %c0_1 = arith.constant 0 : index
    %3 = vector.load %arg2[%c0, %c0_1] : memref<8x32xbf16, #tpu.memory_space<vmem>>, vector<8x32xbf16>
    %c0_2 = arith.constant 0 : index
    %c0_3 = arith.constant 0 : index
    %4 = vector.load %arg3[%c0_2, %c0_3] : memref<32x3xbf16, #tpu.memory_space<vmem>>, vector<32x3xbf16>
    %cst = arith.constant dense<0.000000e+00> : vector<8x3xf32>
    %5 = tpu.matmul %3, %4, %cst {dimension_numbers = #tpu.dot_dimension_numbers<[1], [0], [0], [1], [0, 0, 1, 1], [], []>} : vector<8x32xbf16>, vector<32x3xbf16>, vector<8x3xf32> -> vector<8x3xf32>
    %c0_4 = arith.constant 0 : index
    %c0_5 = arith.constant 0 : index
    %6 = vector.load %arg4[%c0_4, %c0_5] : memref<1x3xf32, #tpu.memory_space<vmem>>, vector<1x3xf32>
    %7 = vector.broadcast %6 : vector<1x3xf32> to vector<8x3xf32>
    %8 = arith.addf %5, %7 : vector<8x3xf32>
    %cst_6 = arith.constant 0.000000e+00 : f32
    %9 = vector.broadcast %cst_6 : f32 to vector<8x3xf32>
    %10 = arith.subf %9, %8 : vector<8x3xf32>
    %11 = math.exp %10 : vector<8x3xf32>
    %cst_7 = arith.constant 1.000000e+00 : f32
    %12 = vector.broadcast %cst_7 : f32 to vector<8x3xf32>
    %13 = arith.addf %12, %11 : vector<8x3xf32>
    %cst_8 = arith.constant 1.000000e+00 : f32
    %14 = vector.broadcast %cst_8 : f32 to vector<8x3xf32>
    %15 = arith.divf %14, %13 : vector<8x3xf32>
    %c0_9 = arith.constant 0 : index
    %c0_10 = arith.constant 0 : index
    %c0_11 = arith.constant 0 : index
    %16 = vector.load %arg6[%c0_9, %c0_10, %c0_11] : memref<1x8x128xf32, #tpu.memory_space<vmem>>, vector<1x8x128xf32>
    %cst_12 = arith.constant dense<0xFF800000> : vector<8xf32>
    %17 = vector.multi_reduction <maximumf>, %15, %cst_12 [1] : vector<8x3xf32> to vector<8xf32>
    %18 = vector.shape_cast %17 : vector<8xf32> to vector<8x1xf32>
    %19 = vector.broadcast %18 : vector<8x1xf32> to vector<8x3xf32>
    %20 = arith.subf %15, %19 : vector<8x3xf32>
    %21 = math.exp %20 : vector<8x3xf32>
    %cst_13 = arith.constant dense<0.000000e+00> : vector<8xf32>
    %22 = vector.multi_reduction <add>, %21, %cst_13 [1] : vector<8x3xf32> to vector<8xf32>
    %23 = vector.shape_cast %22 : vector<8xf32> to vector<8x1xf32>
    %24 = math.log %23 : vector<8x1xf32>
    %25 = arith.addf %18, %24 : vector<8x1xf32>
    %26 = vector.broadcast %25 : vector<8x1xf32> to vector<8x3xf32>
    %27 = arith.subf %15, %26 : vector<8x3xf32>
    %28 = tpu.iota {dimensions = array<i32: 1>} : vector<8x3xi32>
    %c0_14 = arith.constant 0 : index
    %c0_15 = arith.constant 0 : index
    %29 = vector.load %arg5[%c0_14, %c0_15] : memref<8x1xi32, #tpu.memory_space<vmem>>, vector<8x1xi32>
    %30 = vector.broadcast %29 : vector<8x1xi32> to vector<8x3xi32>
    %31 = arith.cmpi eq, %28, %30 : vector<8x3xi32>
    %cst_16 = arith.constant 0.000000e+00 : f32
    %32 = vector.broadcast %cst_16 : f32 to vector<8x3xf32>
    %33 = arith.select %31, %27, %32 : vector<8x3xi1>, vector<8x3xf32>
    %cst_17 = arith.constant dense<0.000000e+00> : vector<8xf32>
    %34 = vector.multi_reduction <add>, %33, %cst_17 [1] : vector<8x3xf32> to vector<8xf32>
    %35 = vector.shape_cast %34 : vector<8xf32> to vector<8x1xf32>
    %cst_18 = arith.constant 0.000000e+00 : f32
    %36 = vector.broadcast %cst_18 : f32 to vector<8x1xf32>
    %37 = arith.subf %36, %35 : vector<8x1xf32>
    %38 = vector.shape_cast %37 : vector<8x1xf32> to vector<1x8x1xf32>
    %cst_19 = arith.constant dense<0.000000e+00> : vector<1xf32>
    %39 = vector.multi_reduction <add>, %38, %cst_19 [1, 2] : vector<1x8x1xf32> to vector<1xf32>
    %40 = vector.shape_cast %39 : vector<1xf32> to vector<1x1x1xf32>
    %41 = vector.extract %40[0, 0, 0] : f32 from vector<1x1x1xf32>
    %42 = vector.broadcast %41 : f32 to vector<1x8x128xf32>
    %43 = arith.addf %16, %42 : vector<1x8x128xf32>
    %c0_20 = arith.constant 0 : index
    %c0_21 = arith.constant 0 : index
    %c0_22 = arith.constant 0 : index
    %44 = vector.load %arg6[%c0_20, %c0_21, %c0_22] : memref<1x8x128xf32, #tpu.memory_space<vmem>>, vector<1x8x128xf32>
    tpu.vector_store %arg6[%c0_20, %c0_21, %c0_22], %43 {strides = array<i32>} : memref<1x8x128xf32, #tpu.memory_space<vmem>>, vector<1x8x128xf32>,
    return
  }
  func.func @transform_0(%arg0: i32, %arg1: i32) -> (i32, i32) {
    %c1_i32 = arith.constant 1 : i32
    %0 = arith.muli %arg0, %c1_i32 : i32
    %1 = arith.addi %0, %arg1 : i32
    %c0_i32 = arith.constant 0 : i32
    %c0_i32_0 = arith.constant 0 : i32
    return %1, %c0_i32 : i32, i32
  }
  func.func @transform_1(%arg0: i32, %arg1: i32) -> (i32, i32) {
    %c0_i32 = arith.constant 0 : i32
    %c0_i32_0 = arith.constant 0 : i32
    %c0_i32_1 = arith.constant 0 : i32
    return %c0_i32, %c0_i32_0 : i32, i32
  }
  func.func @transform_2(%arg0: i32, %arg1: i32) -> (i32, i32) {
    %c0_i32 = arith.constant 0 : i32
    %c0_i32_0 = arith.constant 0 : i32
    %c0_i32_1 = arith.constant 0 : i32
    return %c0_i32, %c0_i32_0 : i32, i32
  }
  func.func @transform_3(%arg0: i32, %arg1: i32) -> (i32, i32) {
    %c1_i32 = arith.constant 1 : i32
    %0 = arith.muli %arg0, %c1_i32 : i32
    %1 = arith.addi %0, %arg1 : i32
    %c0_i32 = arith.constant 0 : i32
    %c0_i32_0 = arith.constant 0 : i32
    return %1, %c0_i32 : i32, i32
  }
  func.func @transform_4(%arg0: i32, %arg1: i32) -> (i32, i32, i32) {
    %c0_i32 = arith.constant 0 : i32
    %c0_i32_0 = arith.constant 0 : i32
    %c0_i32_1 = arith.constant 0 : i32
    return %arg0, %c0_i32, %c0_i32_0 : i32, i32, i32
  }
}

</mosaic_0001>

<llo_original>
// kernel: tpu_custom_call.1
$region0: #{tpu_custom_call.1}
  #allocation0 [shape = 'u32[]', space=smem, size = 0x4, offset = 0x4, fixed_abs, tag = 'smem constant byte address 0x4 - core index']
  #allocation1 [shape = 'u32[144,128]{1,0:T(1,128)}', space=vmem, size = 0x12000, scoped, tag = 'internal scratch']
  %s0 = inlined_call_operand.vmem [shape: bf16[8,32], index: 0, kind: input, shape index: {}]
  %s1 = inlined_call_operand.vmem [shape: bf16[32,3], index: 1, kind: input, shape index: {}]
  %s2 = inlined_call_operand.vmem [shape: f32[1,3], index: 2, kind: input, shape index: {}]
  %s3 = inlined_call_operand.vmem [shape: s32[8,1], index: 3, kind: input, shape index: {}]
  %s4 = inlined_call_operand.hbm [shape: f32[1,8,128], index: 4, kind: output, shape index: {}]
  %s5 = sld [smem:[#allocation0]]
  $region30: #{tpu_custom_call.1} parent=0
    _
  %s7 = ssub.s32 1, %s5
  %s8 = scalar_select 0, %s7, %s5
  $region1: #{tpu_custom_call.1} parent=0
    #allocation2 [shape = 'u8[4096]{0}', space=vmem, size = 0x1000, scoped, tag = 'output window, operand 0, single buffered']
    #allocation3 [shape = 's32[1]{0}', space=sflag, size = 0x4, scoped, tag = 'scoped memory for tpu_custom_call.1']
    %9 = vsyncpa [#allocation3], 0
    // Predicated region
    $region2: #{tpu_custom_call.1} parent=1 // pred_check
      _
    $region3: #{tpu_custom_call.1} parent=1 // pred_check_branch
      %11 = sbr.rel (0) target = $region5
    $region4: #{tpu_custom_call.1} parent=1 // pred_region
      %s12 = sadd.s32 0, 0
      %p13 = scmp.lt.s32.totalorder %s12, 0
      %s14 = scalar_select %p13, %s12, 0
      %s15 = smul.addr %s14, 4
      %s16 = scalar_lea.vmem %s0, %s15
      %s17 = sadd.s32 0, 0
    $region5: #{tpu_custom_call.1} parent=1 // pred_fallthru
      _
    // Predicated region
    $region6: #{tpu_custom_call.1} parent=1 // pred_check
      _
    $region7: #{tpu_custom_call.1} parent=1 // pred_check_branch
      %19 = sbr.rel (0) target = $region9
    $region8: #{tpu_custom_call.1} parent=1 // pred_region
      _
    $region9: #{tpu_custom_call.1} parent=1 // pred_fallthru
      _
    // Predicated region
    $region10: #{tpu_custom_call.1} parent=1 // pred_check
      _
    $region11: #{tpu_custom_call.1} parent=1 // pred_check_branch
      %21 = sbr.rel (0) target = $region13
    $region12: #{tpu_custom_call.1} parent=1 // pred_region
      _
    $region13: #{tpu_custom_call.1} parent=1 // pred_fallthru
      _
    // Predicated region
    $region14: #{tpu_custom_call.1} parent=1 // pred_check
      _
    $region15: #{tpu_custom_call.1} parent=1 // pred_check_branch
      %23 = sbr.rel (0) target = $region17
    $region16: #{tpu_custom_call.1} parent=1 // pred_region
      %s24 = sadd.s32 0, 0
      %p25 = scmp.lt.s32.totalorder %s24, 0
      %s26 = scalar_select %p25, %s24, 0
      %s27 = smul.addr %s26, 8
      %s28 = scalar_lea.vmem %s3, %s27
      %s29 = sadd.s32 0, 0
    $region17: #{tpu_custom_call.1} parent=1 // pred_fallthru
      _
    %s30 = sadd.s32 0, 0
    %p31 = scmp.lt.s32.totalorder %s30, 0
    %s32 = scalar_select %p31, %s30, 0
    %s33 = smul.addr %s32, 4
    %s34 = scalar_lea.vmem %s0, %s33
    %s35 = sadd.s32 0, 0
    %p36 = scmp.lt.s32.totalorder %s35, 0
    %s37 = scalar_select %p36, %s35, 0
    %s38 = smul.addr %s37, 8
    %s39 = scalar_lea.vmem %s3, %s38
    %s40 = sadd.s32 0, 0
    %p41 = scmp.lt.s32.totalorder %s40, 0
    %s42 = scalar_select %p41, %s40, 0
    %s43 = smul.addr %s42, 4
    %s44 = scalar_lea.vmem %s0, %s43
    %s45 = sadd.s32 0, 0
    %s46 = sadd.s32 0, 0
    %p47 = scmp.lt.s32.totalorder %s46, 0
    %s48 = scalar_select %p47, %s46, 0
    %s49 = smul.addr %s48, 8
    %s50 = scalar_lea.vmem %s3, %s49
    %s51 = sadd.s32 0, 0
    %p53 = scmp.eq.s32.totalorder 0, 0
    // Predicated region
    $region18: #{tpu_custom_call.1} parent=1 // pred_check
      %p54 = pneg %p53
    $region19: #{tpu_custom_call.1} parent=1 // pred_check_branch
      %56 = sbr.rel (%p54) target = $region21
    $region20: #{tpu_custom_call.1} parent=1 // pred_region
      %57 = vst [vmem:[#allocation2] sm:$0xff] 0.0
    $region21: #{tpu_custom_call.1} parent=1 // pred_fallthru
      _
    %v58 = vld [vmem:[%s44] sm:$0xf]
    %v59 = vld [vmem:[%s1] sm:$0xf]
    %v60 = vld [vmem:[%s1 + $0x4] sm:$0xf]
    %v61 = vld [vmem:[%s1 + $0x8] sm:$0xf]
    %v62 = vld [vmem:[%s1 + $0xc] sm:$0xf]
    %v63 = vld [vmem:[%s2] sm:$0x1]
    %v65 = vlaneseq
    %v66 = vshrl.u32 %v65, 7
    %v67 = vsub.s32 0, %v66
    %v68 = vrot.slane %v63, %v67
    %v74 = vunpack.c.l.b16 %v59
    %v75 = vunpack.c.l.b16 %v60
    %v76 = vunpack.c.l.b16 %v61
    %v77 = vunpack.c.l.b16 %v62
    %v78 = vpack.c.b16 %v75, %v74
    %v79 = vpack.c.b16 %v77, %v76
    %vm82 = vcmask 261120
    %v84 = vsel %vm82, %v58, 0
    %86 = vmatprep.subr.bf16.mxu0 0
    %87 = vmatpush1.bf16.msra.mxu0 %v78
    %88 = vmatprep.subr.bf16.mxu0 0
    %89 = vmatpush1.bf16.msra.mxu0 %v79
    %90 = vmatprep.subr.bf16.mxu0 0
    %91 = vmatpush1.bf16.msra.mxu0 0
    %92 = vmatprep.subr.bf16.mxu0 0
    %93 = vmatpush1.bf16.msra.mxu0 0
    %94 = vmatprep.subr.bf16.mxu0 0
    %95 = vmatpush1.bf16.msra.mxu0 0
    %96 = vmatprep.subr.bf16.mxu0 0
    %97 = vmatpush1.bf16.msra.mxu0 0
    %98 = vmatprep.subr.bf16.mxu0 0
    %99 = vmatpush1.bf16.msra.mxu0 0
    %100 = vmatprep.subr.bf16.mxu0 0
    %101 = vmatpush1.bf16.msra.mxu0 0
    %102 = vmatprep.subr.bf16.mxu0 0
    %103 = vmatpush1.bf16.msra.mxu0 0
    %104 = vmatprep.subr.bf16.mxu0 0
    %105 = vmatpush1.bf16.msra.mxu0 0
    %106 = vmatprep.subr.bf16.mxu0 0
    %107 = vmatpush1.bf16.msra.mxu0 0
    %108 = vmatprep.subr.bf16.mxu0 0
    %109 = vmatpush1.bf16.msra.mxu0 0
    %110 = vmatprep.subr.bf16.mxu0 0
    %111 = vmatpush1.bf16.msra.mxu0 0
    %112 = vmatprep.subr.bf16.mxu0 0
    %113 = vmatpush1.bf16.msra.mxu0 0
    %114 = vmatprep.subr.bf16.mxu0 0
    %115 = vmatpush1.bf16.msra.mxu0 0
    %116 = vmatprep.subr.bf16.mxu0 0
    %117 = vmatpush1.bf16.msra.mxu0 0
    %118 = vmatprep.mubr.bf16.mxu0 0
    %119 = vmatmul.mubr.bf16.gmra.mrb[0].mxu0 %v84
    %v120 = vpop.f32.mrb[0].mxu0
    %v121 = vadd.f32 %v68, %v120
    %v122 = vpop.f32.mrb[0].mxu0
    %v123 = vpop.f32.mrb[0].mxu0
    %v124 = vpop.f32.mrb[0].mxu0
    %125 = vdwg.mxu0
    %v126 = vsub.f32 0.0, %v121
    %v127 = vmul.f32 %v126, 1.442695
    %v128 = vpow.pop %v127
    %v129 = vadd.f32 %v128, 1.0
    %v130 = vrcp.pop %v129
    %v131 = vmul.f32 1.0, %v130
    %v132 = vld [vmem:[#allocation2] sm:$0xff]
    %vm133 = vcmask 23552
    %v134 = vsel %vm133, %v131, -inf
    %135 = vmax.xlane.f32.xlu0 %v134
    %v136 = vpop.xlane.xlu0 %135
    %v137 = vsub.f32 %v131, %v136
    %v138 = vmul.f32 %v137, 1.442695
    %v139 = vpow.pop %v138
    %v140 = vsel %vm133, %v139, 0.0
    %141 = vadd.xlane.f32.xlu0 %v140
    %v142 = vpop.xlane.xlu0 %141
    %v143 = vlog2.pop %v142
    %v144 = vmul.f32 %v143, 0.6931472
    %v145 = vadd.f32 %v136, %v144
    %v146 = vsub.f32 %v131, %v145
    %v147 = vlaneseq
    %v148 = vand.u32 %v147, 127
    %v149 = vld [vmem:[%s50] sm:$0xff]
    %150 = vset.pattern.permute.xlu0 0
    %151 = vperm.xlu0 %150, %v149
    %v152 = vpop.permute.xlu0 %151
    %vm153 = vcmp.eq.s32.totalorder %v148, %v152
    %v154 = vsel %vm153, %v146, 0.0
    %v155 = vsel %vm133, %v154, 0.0
    %156 = vadd.xlane.f32.xlu0 %v155
    %v157 = vpop.xlane.xlu0 %156
    %v158 = vsub.f32 0.0, %v157
    %vm159 = vcmask 7168
    %v160 = vsel %vm159, %v158, 0.0
    %161 = vadd.xlane.f32.xlu0 %v160
    %v162 = vpop.xlane.xlu0 %161
    %v163 = vrot.slane %v162, 4
    %v164 = vadd.f32 %v162, %v163
    %v165 = vrot.slane %v164, 2
    %v166 = vadd.f32 %v164, %v165
    %v167 = vrot.slane %v166, 1
    %v168 = vadd.f32 %v166, %v167
    %s169 = vtos %v168
    %v170 = vstv %s169
    %v171 = vadd.f32 %v132, %v170
    %172 = vst [vmem:[#allocation2] sm:$0xff] %v171
    // Predicated region
    $region22: #{tpu_custom_call.1} parent=1 // pred_check
      _
    $region23: #{tpu_custom_call.1} parent=1 // pred_check_branch
      %174 = sbr.rel (0) target = $region25
    $region24: #{tpu_custom_call.1} parent=1 // pred_region
      %s176 = ssub.s32 128, 128
      %177 = vsyncadd [#allocation3], %s176
      %s179 = sshll.u32 [#allocation2], 4
      %s180 = int_to_ptr.vmem [resolvable:$true] %s179
      %182 = dma.vmem_to_hbm [thread:$0]  %s180, 128, %s4, [#allocation3]
    $region25: #{tpu_custom_call.1} parent=1 // pred_fallthru
      _
    // Predicated region
    $region26: #{tpu_custom_call.1} parent=1 // pred_check
      _
    $region27: #{tpu_custom_call.1} parent=1 // pred_check_branch
      %184 = sbr.rel (0) target = $region29
    $region28: #{tpu_custom_call.1} parent=1 // pred_region
      %185 = dma.done [#allocation3], 128
    $region29: #{tpu_custom_call.1} parent=1 // pred_fallthru
      _
    %186 = vsyncpa [#allocation3], 1

</llo_original>
